<compile_context>
chip_gen: v7x
topology: tpu7x:2x2x1
jax: 0.10.0
libtpu: 0.0.40
codegen_flags: <defaults>
</compile_context>

<pallas_src>
import math

import jax
import jax.numpy as jnp
from jax.experimental import pallas as pl
from jax.experimental.pallas import tpu as pltpu


def attention_ori_context_kernel(x_ref, m_ref, w_ref, bv_ref, res_ref, score_ref):
    """One block of Bt batch rows per grid step.

    x_ref     : [Bt, S, D]   feature block (compute dtype, e.g. bf16)
    m_ref     : [Bt, 1, S]   mask block, f32 (1 = valid, 0 = pad), lane-dense
    w_ref     : [D, H+1]     fused weight: cols 0..H-1 = fv weight, col H = (Wk @ ctx) * scale
    bv_ref    : [1, H]       fv bias (added once to the pooled result)
    res_ref   : [Bt, 1, H]   pooled output block
    score_ref : [Bt, 1, S]   attention-score block (lane-dense)
    """
    bt, s, d = x_ref.shape
    h = bv_ref.shape[-1]

    # One MXU matmul over the whole block: value columns + ratio column together.
    x = x_ref[...].reshape(bt * s, d)                       # collapse leading dims (free)
    fused = jnp.dot(x, w_ref[...], preferred_element_type=jnp.float32)   # [Bt*S, H+1] f32

    value = fused[:, :h].reshape(bt, s, h)                  # [Bt, S, H] f32
    # Ratio column -> lane-dense [Bt, 1, S] (small XLU relayout; everything downstream is
    # full-lane vectors instead of 1/128-lane columns).
    ratio = jnp.swapaxes(fused[:, h:].reshape(bt, s, 1), 1, 2)           # [Bt, 1, S] f32

    # Masked softmax over the sequence axis, f32 (exact module semantics; the folded ratio
    # bias is a per-row constant shift and therefore a softmax no-op, so it was dropped).
    m = m_ref[...]                                          # [Bt, 1, S]
    masked = ratio * m + (m - 1.0) * 1e9
    mx = jnp.max(masked, axis=-1, keepdims=True)
    e = jnp.exp(masked - mx)
    denom = jnp.sum(e, axis=-1, keepdims=True)
    score = e * pl.reciprocal(denom)                        # [Bt, 1, S]
    # TODO(synk): nn.Dropout(config.rnn.dropout) on the score is identity in eval mode;
    # train-mode stochastic dropout is not implemented.

    score_ref[...] = score

    # Pooled result: batched [1,S] @ [S,H] per batch row; fv bias added once since
    # sum_s(score) == 1.
    res = jnp.einsum('bqs,bsh->bqh', score, value, preferred_element_type=jnp.float32)
    res_ref[...] = res + bv_ref[...]                        # [Bt, 1, H]


def _pick_block_b(batch, seq, d_in, itemsize, vmem_block_budget=4 << 20):
    """Largest divisor of `batch` whose (Bt, S, D) feature block stays under the budget.

    Prefers a grid of length >= 2 so both v7x TensorCores get work; the default 4 MiB
    per-buffer budget (x2 for double-buffering) keeps blocks safely under the scoped VMEM
    limit on v5e/v6e (32 MiB) and v7x (64 MiB physical).
    """
    candidates = [bb for bb in range(1, batch + 1)
                  if batch % bb == 0 and bb * seq * d_in * itemsize <= vmem_block_budget]
    if not candidates:
        return 1
    two_step = [bb for bb in candidates if batch // bb >= 2]
    return max(two_step) if two_step else max(candidates)


def attention_ori_context_forward(feature_bsd, masks_bs, params,
                                  *, compute_dtype=jnp.bfloat16, block_b=None):
    """feature_bsd: [B, S, D_in], masks_bs: [B, S] (1=valid, 0=pad).

    Returns (result [B, H], attention_score [B, S, 1]) matching the PyTorch module.
    """
    B, S, D = feature_bsd.shape
    H = params['hidden_dim']
    scale = float(H) ** (-0.5)

    # One-time parameter folding (plain XLA, outside the kernel):
    #   ratio = (x @ w_fk + b_fk) . ctx * scale  ==  x @ (w_fk @ ctx^T * scale)  + const
    # The constant (b_fk . ctx * scale) is dropped — softmax is shift-invariant per row.
    ctx_col = params['context'].reshape(H, 1).astype(jnp.float32)
    w_ratio = (params['w_fk'].astype(jnp.float32) @ ctx_col) * scale          # [D, 1]
    w_fused = jnp.concatenate(
        [params['w_fv'].astype(jnp.float32), w_ratio], axis=1)                # [D, H+1]
    w_fused = w_fused.astype(compute_dtype)
    bv = params['b_fv'].astype(jnp.float32).reshape(1, H)

    x = feature_bsd.astype(compute_dtype)
    m = masks_bs.astype(jnp.float32).reshape(B, 1, S)                         # lane-dense mask

    if block_b is None:
        block_b = _pick_block_b(B, S, D, jnp.dtype(compute_dtype).itemsize)
    assert B % block_b == 0, (B, block_b)
    grid = (B // block_b,)

    # TODO(synk): for very large S, add a trailing "arbitrary" sequence grid axis with
    # online-softmax accumulators instead of loading the full (Bt, S, D) block.
    res3, score3 = pl.pallas_call(
        attention_ori_context_kernel,
        grid=grid,
        in_specs=[
            pl.BlockSpec((block_b, S, D), lambda b: (b, 0, 0)),   # feature block
            pl.BlockSpec((block_b, 1, S), lambda b: (b, 0, 0)),   # lane-dense mask block
            pl.BlockSpec((D, H + 1), lambda b: (0, 0)),           # fused weight (resident)
            pl.BlockSpec((1, H), lambda b: (0, 0)),               # fv bias
        ],
        out_specs=(
            pl.BlockSpec((block_b, 1, H), lambda b: (b, 0, 0)),
            pl.BlockSpec((block_b, 1, S), lambda b: (b, 0, 0)),
        ),
        out_shape=(
            jax.ShapeDtypeStruct((B, 1, H), jnp.float32),
            jax.ShapeDtypeStruct((B, 1, S), jnp.float32),
        ),
        compiler_params=pltpu.CompilerParams(dimension_semantics=("parallel",)),
    )(x, m, w_fused, bv)

    return res3.reshape(B, H), score3.reshape(B, S, 1)


def init_params(key, input_dim, hidden_dim):
    H = hidden_dim
    scale = 1.0 / math.sqrt(input_dim)
    ks = jax.random.split(key, 5)

    def u(k, shape):
        return jax.random.uniform(k, shape, jnp.float32, -scale, scale)

    return dict(
        hidden_dim=H,
        # nn.Linear weights pre-transposed for x @ W; biases as [1, H].
        w_fk=u(ks[0], (input_dim, H)),
        b_fk=u(ks[1], (1, H)),
        w_fv=u(ks[2], (input_dim, H)),
        b_fv=u(ks[3], (1, H)),
        # nn.Parameter(torch.rand(1, hidden_dim))
        context=jax.random.uniform(ks[4], (1, H), jnp.float32, 0.0, 1.0),
    )


def reference_forward(feature, masks, p):
    """Pure-JAX reference mirroring the PyTorch module (with_value_fn=True, eval dropout)."""
    H = p['hidden_dim']
    scale = float(H) ** (-0.5)
    key = feature @ p['w_fk'] + p['b_fk']                                # [B, S, H]
    value = feature @ p['w_fv'] + p['b_fv']                              # [B, S, H]
    ratio = jnp.sum(key * p['context'][None, :, :], axis=-1) * scale     # [B, S]
    max_ratio = ratio * masks + (masks - 1.0) * 1e9
    score = jax.nn.softmax(max_ratio, axis=-1)[..., None]                # [B, S, 1]
    result = jnp.sum(score * value, axis=1)                              # [B, H]
    return result, score


if __name__ == "__main__":
    B, S, D_IN, H = 2, 8, 16, 32

    key = jax.random.PRNGKey(0)
    k_x, k_p = jax.random.split(key)

    feature = jax.random.normal(k_x, (B, S, D_IN), jnp.float32)
    lengths = jnp.array([S, 5])  # second example has a padded tail
    masks = (jnp.arange(S)[None, :] < lengths[:, None]).astype(jnp.float32)

    params = init_params(k_p, D_IN, H)
    ref_result, ref_score = reference_forward(feature, masks, params)

    # f32 path: tight tolerance vs the f32 reference.
    res32, sc32 = attention_ori_context_forward(feature, masks, params,
                                                compute_dtype=jnp.float32)
    res32 = jax.block_until_ready(res32)
    sc32 = jax.block_until_ready(sc32)
    assert res32.shape == (B, H), res32.shape
    assert sc32.shape == (B, S, 1), sc32.shape
    assert jnp.allclose(res32, ref_result, atol=2e-4, rtol=2e-4), \
        float(jnp.max(jnp.abs(res32 - ref_result)))
    assert jnp.allclose(sc32, ref_score, atol=2e-4, rtol=2e-4), \
        float(jnp.max(jnp.abs(sc32 - ref_score)))

    # Default bf16 feature/weight traffic (f32 accumulation + f32 softmax): looser tolerance.
    res16, sc16 = attention_ori_context_forward(feature, masks, params)
    res16 = jax.block_until_ready(res16)
    sc16 = jax.block_until_ready(sc16)
    assert res16.shape == (B, H), res16.shape
    assert sc16.shape == (B, S, 1), sc16.shape
    assert jnp.allclose(res16, ref_result, atol=3e-2, rtol=3e-2), \
        float(jnp.max(jnp.abs(res16 - ref_result)))
    assert jnp.allclose(sc16, ref_score, atol=3e-2, rtol=3e-2), \
        float(jnp.max(jnp.abs(sc16 - ref_score)))

    print("KERNEL_OK")
</pallas_src>

<mosaic_0001>
module attributes {stable_mosaic.version = 11 : i64} {
  func.func @attention_ori_context_kernel(%arg0: i32, %arg1: memref<1x8x16xf32, #tpu.memory_space<vmem>>, %arg2: memref<1x1x8xf32, #tpu.memory_space<vmem>>, %arg3: memref<16x33xf32, #tpu.memory_space<vmem>>, %arg4: memref<1x32xf32, #tpu.memory_space<vmem>>, %arg5: memref<1x1x32xf32, #tpu.memory_space<vmem>>, %arg6: memref<1x1x8xf32, #tpu.memory_space<vmem>>) attributes {dimension_semantics = [#tpu.dimension_semantics<parallel>], iteration_bounds = array<i64: 2>, scalar_prefetch = 0 : i64, scratch_operands = 0 : i64, tpu.core_type = #tpu.core_type<tc>, window_params = [{transform_indices = @transform_0, window_bounds = array<i64: 1, 8, 16>}, {transform_indices = @transform_1, window_bounds = array<i64: 1, 1, 8>}, {pipeline_mode = #tpu.pipeline_mode<synchronous>, transform_indices = @transform_2, window_bounds = array<i64: 16, 33>}, {pipeline_mode = #tpu.pipeline_mode<synchronous>, transform_indices = @transform_3, window_bounds = array<i64: 1, 32>}, {transform_indices = @transform_4, window_bounds = array<i64: 1, 1, 32>}, {transform_indices = @transform_5, window_bounds = array<i64: 1, 1, 8>}]} {
    %c0 = arith.constant 0 : index
    %c0_0 = arith.constant 0 : index
    %c0_1 = arith.constant 0 : index
    %0 = vector.load %arg1[%c0, %c0_0, %c0_1] : memref<1x8x16xf32, #tpu.memory_space<vmem>>, vector<1x8x16xf32>
    %1 = vector.shape_cast %0 : vector<1x8x16xf32> to vector<8x16xf32>
    %c0_2 = arith.constant 0 : index
    %c0_3 = arith.constant 0 : index
    %2 = vector.load %arg3[%c0_2, %c0_3] : memref<16x33xf32, #tpu.memory_space<vmem>>, vector<16x33xf32>
    %cst = arith.constant dense<0.000000e+00> : vector<8x33xf32>
    %3 = tpu.matmul %1, %2, %cst {dimension_numbers = #tpu.dot_dimension_numbers<[1], [0], [0], [1], [0, 0, 1, 1], [], []>} : vector<8x16xf32>, vector<16x33xf32>, vector<8x33xf32> -> vector<8x33xf32>
    %4 = vector.extract_strided_slice %3 {offsets = [0, 0], sizes = [8, 32], strides = [1, 1]} : vector<8x33xf32> to vector<8x32xf32>
    %5 = vector.shape_cast %4 : vector<8x32xf32> to vector<1x8x32xf32>
    %6 = vector.extract_strided_slice %3 {offsets = [0, 32], sizes = [8, 1], strides = [1, 1]} : vector<8x33xf32> to vector<8x1xf32>
    %7 = vector.shape_cast %6 : vector<8x1xf32> to vector<1x8x1xf32>
    %8 = tpu.transpose %7, [0, 2, 1] : vector<1x8x1xf32> -> vector<1x1x8xf32>
    %c0_4 = arith.constant 0 : index
    %c0_5 = arith.constant 0 : index
    %c0_6 = arith.constant 0 : index
    %9 = vector.load %arg2[%c0_4, %c0_5, %c0_6] : memref<1x1x8xf32, #tpu.memory_space<vmem>>, vector<1x1x8xf32>
    %10 = arith.mulf %8, %9 : vector<1x1x8xf32>
    %cst_7 = arith.constant 1.000000e+00 : f32
    %11 = vector.broadcast %cst_7 : f32 to vector<1x1x8xf32>
    %12 = arith.subf %9, %11 : vector<1x1x8xf32>
    %cst_8 = arith.constant 1.000000e+09 : f32
    %13 = vector.broadcast %cst_8 : f32 to vector<1x1x8xf32>
    %14 = arith.mulf %12, %13 : vector<1x1x8xf32>
    %15 = arith.addf %10, %14 : vector<1x1x8xf32>
    %cst_9 = arith.constant dense<0xFF800000> : vector<1x1xf32>
    %16 = vector.multi_reduction <maximumf>, %15, %cst_9 [2] : vector<1x1x8xf32> to vector<1x1xf32>
    %17 = vector.shape_cast %16 : vector<1x1xf32> to vector<1x1x1xf32>
    %18 = vector.broadcast %17 : vector<1x1x1xf32> to vector<1x1x8xf32>
    %19 = arith.subf %15, %18 : vector<1x1x8xf32>
    %20 = math.exp %19 : vector<1x1x8xf32>
    %cst_10 = arith.constant dense<0.000000e+00> : vector<1x1xf32>
    %21 = vector.multi_reduction <add>, %20, %cst_10 [2] : vector<1x1x8xf32> to vector<1x1xf32>
    %22 = vector.shape_cast %21 : vector<1x1xf32> to vector<1x1x1xf32>
    %23 = tpu.reciprocal %22 : vector<1x1x1xf32> -> vector<1x1x1xf32>
    %24 = vector.broadcast %23 : vector<1x1x1xf32> to vector<1x1x8xf32>
    %25 = arith.mulf %20, %24 : vector<1x1x8xf32>
    %c0_11 = arith.constant 0 : index
    %c0_12 = arith.constant 0 : index
    %c0_13 = arith.constant 0 : index
    %26 = vector.load %arg6[%c0_11, %c0_12, %c0_13] : memref<1x1x8xf32, #tpu.memory_space<vmem>>, vector<1x1x8xf32>
    tpu.vector_store %arg6[%c0_11, %c0_12, %c0_13], %25 {strides = array<i32>} : memref<1x1x8xf32, #tpu.memory_space<vmem>>, vector<1x1x8xf32>,
    "tpu.trace_start"() <{level = 10 : i32, message = "bqs,bsh->bqh"}> : () -> ()
    %cst_14 = arith.constant dense<0.000000e+00> : vector<1x1x32xf32>
    %27 = tpu.matmul %25, %5, %cst_14 {dimension_numbers = #tpu.dot_dimension_numbers<[2], [1], [1], [2], [0, 0, 0, 1, 1, 2], [0], [0]>} : vector<1x1x8xf32>, vector<1x8x32xf32>, vector<1x1x32xf32> -> vector<1x1x32xf32>
    "tpu.trace_stop"() : () -> ()
    %c0_15 = arith.constant 0 : index
    %c0_16 = arith.constant 0 : index
    %28 = vector.load %arg4[%c0_15, %c0_16] : memref<1x32xf32, #tpu.memory_space<vmem>>, vector<1x32xf32>
    %29 = vector.shape_cast %28 : vector<1x32xf32> to vector<1x1x32xf32>
    %30 = arith.addf %27, %29 : vector<1x1x32xf32>
    %c0_17 = arith.constant 0 : index
    %c0_18 = arith.constant 0 : index
    %c0_19 = arith.constant 0 : index
    %31 = vector.load %arg5[%c0_17, %c0_18, %c0_19] : memref<1x1x32xf32, #tpu.memory_space<vmem>>, vector<1x1x32xf32>
    tpu.vector_store %arg5[%c0_17, %c0_18, %c0_19], %30 {strides = array<i32>} : memref<1x1x32xf32, #tpu.memory_space<vmem>>, vector<1x1x32xf32>,
    return
  }
  func.func @transform_0(%arg0: i32) -> (i32, i32, i32) {
    %c0_i32 = arith.constant 0 : i32
    %c0_i32_0 = arith.constant 0 : i32
    %c0_i32_1 = arith.constant 0 : i32
    return %arg0, %c0_i32, %c0_i32_0 : i32, i32, i32
  }
  func.func @transform_1(%arg0: i32) -> (i32, i32, i32) {
    %c0_i32 = arith.constant 0 : i32
    %c0_i32_0 = arith.constant 0 : i32
    %c0_i32_1 = arith.constant 0 : i32
    return %arg0, %c0_i32, %c0_i32_0 : i32, i32, i32
  }
  func.func @transform_2(%arg0: i32) -> (i32, i32) {
    %c0_i32 = arith.constant 0 : i32
    %c0_i32_0 = arith.constant 0 : i32
    %c0_i32_1 = arith.constant 0 : i32
    return %c0_i32, %c0_i32_0 : i32, i32
  }
  func.func @transform_3(%arg0: i32) -> (i32, i32) {
    %c0_i32 = arith.constant 0 : i32
    %c0_i32_0 = arith.constant 0 : i32
    %c0_i32_1 = arith.constant 0 : i32
    return %c0_i32, %c0_i32_0 : i32, i32
  }
  func.func @transform_4(%arg0: i32) -> (i32, i32, i32) {
    %c0_i32 = arith.constant 0 : i32
    %c0_i32_0 = arith.constant 0 : i32
    %c0_i32_1 = arith.constant 0 : i32
    return %arg0, %c0_i32, %c0_i32_0 : i32, i32, i32
  }
  func.func @transform_5(%arg0: i32) -> (i32, i32, i32) {
    %c0_i32 = arith.constant 0 : i32
    %c0_i32_0 = arith.constant 0 : i32
    %c0_i32_1 = arith.constant 0 : i32
    return %arg0, %c0_i32, %c0_i32_0 : i32, i32, i32
  }
}

</mosaic_0001>

<llo_original>
// kernel: tpu_custom_call.1
$region0: #{tpu_custom_call.1}
  #allocation0 [shape = 'u32[]', space=smem, size = 0x4, offset = 0x4, fixed_abs, tag = 'smem constant byte address 0x4 - core index']
  #allocation1 [shape = 'u32[144,128]{1,0:T(1,128)}', space=vmem, size = 0x12000, scoped, tag = 'internal scratch']
  %s0 = inlined_call_operand.hbm [shape: f32[2,8,16], index: 0, kind: input, shape index: {}]
  %s1 = inlined_call_operand.vmem [shape: f32[2,1,8], index: 1, kind: input, shape index: {}]
  %s2 = inlined_call_operand.hbm [shape: f32[16,33], index: 2, kind: input, shape index: {}]
  %s3 = inlined_call_operand.vmem [shape: f32[1,32], index: 3, kind: input, shape index: {}]
  %s4 = inlined_call_operand.hbm [shape: f32[2,1,32], index: 4, kind: output, shape index: {0}]
  %s5 = inlined_call_operand.hbm [shape: f32[2,1,8], index: 5, kind: output, shape index: {1}]
  %6 = xla_tuple %s4, %s5
  %s7 = sld [smem:[#allocation0]]
  $region65: #{tpu_custom_call.1} parent=0
    _
  %s9 = ssub.s32 1, %s7
  %s10 = scalar_select 0, %s9, %s7
  $region1: #{tpu_custom_call.1} parent=0
    #allocation2 [shape = 'u8[8192]{0}', space=vmem, size = 0x2000, scoped, tag = 'input window, operand 0']
    #allocation3 [shape = 's32[2]{0}', space=sflag, size = 0x8, scoped, tag = 'scoped memory for tpu_custom_call.1']
    #allocation4 [shape = 's32[2]{0}', space=sflag, size = 0x8, scoped, tag = 'scoped memory for tpu_custom_call.1']
    #allocation5 [shape = 'u8[8192]{0}', space=vmem, size = 0x2000, scoped, tag = 'input window, operand 2, single buffered']
    #allocation6 [shape = 's32[1]{0}', space=sflag, size = 0x4, scoped, tag = 'scoped memory for tpu_custom_call.1']
    #allocation7 [shape = 'u8[1024]{0}', space=vmem, size = 0x400, scoped, tag = 'output window, operand 0']
    #allocation8 [shape = 'u8[1024]{0}', space=vmem, size = 0x400, scoped, tag = 'output window, operand 1']
    #allocation9 [shape = 's32[2]{0}', space=sflag, size = 0x8, scoped, tag = 'scoped memory for tpu_custom_call.1']
    %11 = vsyncpa [#allocation3], 0
    %s12 = scalar_lea.sflag [#allocation3], 1
    %13 = vsyncpa %s12, 0
    %14 = vsyncpa [#allocation6], 0
    %15 = vsyncpa [#allocation4], 0
    %s16 = scalar_lea.sflag [#allocation4], 1
    %17 = vsyncpa %s16, 0
    %18 = vsyncpa [#allocation9], 0
    %s19 = scalar_lea.sflag [#allocation9], 1
    %20 = vsyncpa %s19, 0
    loop: start=0, step=1, limit=4
    $region2: #{tpu_custom_call.1} parent=1 // loop_pre_header
      _
    $region3: #{tpu_custom_call.1} parent=1 // loop_header
      %s22 = sphi 0, %s26
      %p23 = scmp.ge.s32.totalorder %s22, 4
      %s32 = sphi 0, %s34
      %s35 = sphi 0, %s32
      %s36 = sphi 0, %s35
      %s52 = sphi 0, %s36
      %s58 = sphi 0, %s60
      %s61 = sphi 0, %s58
      %s62 = sphi 0, %s61
      %s78 = sphi 0, %s62
      %s82 = sphi 0, %s82
      %s84 = sphi 0, %s82
      %s85 = sphi 0, %s84
      %s99 = sphi 0, %s85
      %s103 = sphi 0, %s103
      %s105 = sphi 0, %s103
      %s106 = sphi 0, %s105
      %s120 = sphi 0, %s106
      %s126 = sphi 0, %s128
      %s129 = sphi 0, %s126
      %s130 = sphi 0, %s129
      %s146 = sphi 0, %s130
      %s152 = sphi 0, %s154
      %s155 = sphi 0, %s152
      %s156 = sphi 0, %s155
      %s172 = sphi 0, %s156
    $region4: #{tpu_custom_call.1} parent=1 // loop_header_branch
      %25 = sbr.rel (%p23) target = $region8
    $region5: #{tpu_custom_call.1} parent=1 // loop_body
      %s27 = ssub.s32 %s22, 1
      %s28 = ssub.s32 %s22, 2
      %s29 = sadd.s32 %s22, 1
      %s30 = ssub.s32 %s22, %s29
      %p31 = scmp.eq.s32.totalorder %s30, 0
      %s33 = sadd.s32 %s32, 1
      %s34 = scalar_select %p31, %s32, %s33
      %p37 = pneg %p31
      %p38 = scmp.eq.s32.totalorder %s22, 1
      %p39 = por %p37, %p38
      %p40 = scmp.ne.s32.totalorder %s32, %s35
      %p41 = scmp.eq.s32.totalorder %s22, 0
      %p42 = por %p40, %p41
      %p43 = scmp.ne.s32.totalorder %s32, %s35
      %p44 = scmp.eq.s32.totalorder %s27, 1
      %p45 = por %p43, %p44
      %p46 = scmp.ne.s32.totalorder %s35, %s36
      %p47 = scmp.eq.s32.totalorder %s27, 0
      %p48 = por %p46, %p47
      %p49 = scmp.ne.s32.totalorder %s35, %s36
      %p50 = scmp.eq.s32.totalorder %s28, 1
      %p51 = por %p49, %p50
      %p53 = scmp.ne.s32.totalorder %s36, %s52
      %p54 = scmp.eq.s32.totalorder %s28, 0
      %p55 = por %p53, %p54
      %s56 = ssub.s32 %s22, %s29
      %p57 = scmp.eq.s32.totalorder %s56, 0
      %s59 = sadd.s32 %s58, 1
      %s60 = scalar_select %p57, %s58, %s59
      %p63 = pneg %p57
      %p64 = scmp.eq.s32.totalorder %s22, 1
      %p65 = por %p63, %p64
      %p66 = scmp.ne.s32.totalorder %s58, %s61
      %p67 = scmp.eq.s32.totalorder %s22, 0
      %p68 = por %p66, %p67
      %p69 = scmp.ne.s32.totalorder %s58, %s61
      %p70 = scmp.eq.s32.totalorder %s27, 1
      %p71 = por %p69, %p70
      %p72 = scmp.ne.s32.totalorder %s61, %s62
      %p73 = scmp.eq.s32.totalorder %s27, 0
      %p74 = por %p72, %p73
      %p75 = scmp.ne.s32.totalorder %s61, %s62
      %p76 = scmp.eq.s32.totalorder %s28, 1
      %p77 = por %p75, %p76
      %p79 = scmp.ne.s32.totalorder %s62, %s78
      %p80 = scmp.eq.s32.totalorder %s28, 0
      %p81 = por %p79, %p80
      %s83 = sadd.s32 %s82, 1
      %p86 = scmp.eq.s32.totalorder %s22, 1
      %p87 = scmp.ne.s32.totalorder %s82, %s84
      %p88 = scmp.eq.s32.totalorder %s22, 0
      %p89 = por %p87, %p88
      %p90 = scmp.ne.s32.totalorder %s82, %s84
      %p91 = scmp.eq.s32.totalorder %s27, 1
      %p92 = por %p90, %p91
      %p93 = scmp.ne.s32.totalorder %s84, %s85
      %p94 = scmp.eq.s32.totalorder %s27, 0
      %p95 = por %p93, %p94
      %p96 = scmp.ne.s32.totalorder %s84, %s85
      %p97 = scmp.eq.s32.totalorder %s28, 1
      %p98 = por %p96, %p97
      %p100 = scmp.ne.s32.totalorder %s85, %s99
      %p101 = scmp.eq.s32.totalorder %s28, 0
      %p102 = por %p100, %p101
      %s104 = sadd.s32 %s103, 1
      %p107 = scmp.eq.s32.totalorder %s22, 1
      %p108 = scmp.ne.s32.totalorder %s103, %s105
      %p109 = scmp.eq.s32.totalorder %s22, 0
      %p110 = por %p108, %p109
      %p111 = scmp.ne.s32.totalorder %s103, %s105
      %p112 = scmp.eq.s32.totalorder %s27, 1
      %p113 = por %p111, %p112
      %p114 = scmp.ne.s32.totalorder %s105, %s106
      %p115 = scmp.eq.s32.totalorder %s27, 0
      %p116 = por %p114, %p115
      %p117 = scmp.ne.s32.totalorder %s105, %s106
      %p118 = scmp.eq.s32.totalorder %s28, 1
      %p119 = por %p117, %p118
      %p121 = scmp.ne.s32.totalorder %s106, %s120
      %p122 = scmp.eq.s32.totalorder %s28, 0
      %p123 = por %p121, %p122
      %s124 = ssub.s32 %s22, %s29
      %p125 = scmp.eq.s32.totalorder %s124, 0
      %s127 = sadd.s32 %s126, 1
      %s128 = scalar_select %p125, %s126, %s127
      %p131 = pneg %p125
      %p132 = scmp.eq.s32.totalorder %s22, 1
      %p133 = por %p131, %p132
      %p134 = scmp.ne.s32.totalorder %s126, %s129
      %p135 = scmp.eq.s32.totalorder %s22, 0
      %p136 = por %p134, %p135
      %p137 = scmp.ne.s32.totalorder %s126, %s129
      %p138 = scmp.eq.s32.totalorder %s27, 1
      %p139 = por %p137, %p138
      %p140 = scmp.ne.s32.totalorder %s129, %s130
      %p141 = scmp.eq.s32.totalorder %s27, 0
      %p142 = por %p140, %p141
      %p143 = scmp.ne.s32.totalorder %s129, %s130
      %p144 = scmp.eq.s32.totalorder %s28, 1
      %p145 = por %p143, %p144
      %p147 = scmp.ne.s32.totalorder %s130, %s146
      %p148 = scmp.eq.s32.totalorder %s28, 0
      %p149 = por %p147, %p148
      %s150 = ssub.s32 %s22, %s29
      %p151 = scmp.eq.s32.totalorder %s150, 0
      %s153 = sadd.s32 %s152, 1
      %s154 = scalar_select %p151, %s152, %s153
      %p157 = pneg %p151
      %p158 = scmp.eq.s32.totalorder %s22, 1
      %p159 = por %p157, %p158
      %p160 = scmp.ne.s32.totalorder %s152, %s155
      %p161 = scmp.eq.s32.totalorder %s22, 0
      %p162 = por %p160, %p161
      %p163 = scmp.ne.s32.totalorder %s152, %s155
      %p164 = scmp.eq.s32.totalorder %s27, 1
      %p165 = por %p163, %p164
      %p166 = scmp.ne.s32.totalorder %s155, %s156
      %p167 = scmp.eq.s32.totalorder %s27, 0
      %p168 = por %p166, %p167
      %p169 = scmp.ne.s32.totalorder %s155, %s156
      %p170 = scmp.eq.s32.totalorder %s28, 1
      %p171 = por %p169, %p170
      %p173 = scmp.ne.s32.totalorder %s156, %s172
      %p174 = scmp.eq.s32.totalorder %s28, 0
      %p175 = por %p173, %p174
      %p176 = scmp.le.s32.totalorder 1, %s22
      %p177 = scmp.lt.s32.totalorder %s22, 3
      %p178 = pnand %p176, %p177
      %p179 = pneg %p178
      // Predicated region
      $region9: #{tpu_custom_call.1} parent=5 // pred_check
        _
      $region10: #{tpu_custom_call.1} parent=5 // pred_check_branch
        %181 = sbr.rel (%p178) target = $region12
      $region11: #{tpu_custom_call.1} parent=5 // pred_region
        %s182 = ssub.s32 %s22, 1
        // Predicated region
        $region13: #{tpu_custom_call.1} parent=11 // pred_check
          %p183 = pneg %p95
        $region14: #{tpu_custom_call.1} parent=11 // pred_check_branch
          %185 = sbr.rel (%p183) target = $region16
        $region15: #{tpu_custom_call.1} parent=11 // pred_region
          %s187 = ssub.s32 256, 256
          %188 = vsyncadd [#allocation6], %s187
          %s189 = sshll.u32 [#allocation5], 4
          %s190 = int_to_ptr.vmem [resolvable:$true] %s189
          %195 = dma.hbm_to_vmem [thread:$0]  %s2, 256, %s190, [#allocation6], 128, 128, 8
        $region16: #{tpu_custom_call.1} parent=11 // pred_fallthru
          _
        // Predicated region
        $region17: #{tpu_custom_call.1} parent=11 // pred_check
          %p196 = pneg %p116
        $region18: #{tpu_custom_call.1} parent=11 // pred_check_branch
          %198 = sbr.rel (%p196) target = $region20
        $region19: #{tpu_custom_call.1} parent=11 // pred_region
          _
        $region20: #{tpu_custom_call.1} parent=11 // pred_fallthru
          _
      $region12: #{tpu_custom_call.1} parent=5 // pred_fallthru
        _
      %p199 = scmp.lt.s32.totalorder %s22, 2
      // Predicated region
      $region21: #{tpu_custom_call.1} parent=5 // pred_check
        %p200 = pneg %p199
      $region22: #{tpu_custom_call.1} parent=5 // pred_check_branch
        %202 = sbr.rel (%p200) target = $region24
      $region23: #{tpu_custom_call.1} parent=5 // pred_region
        // Predicated region
        $region25: #{tpu_custom_call.1} parent=23 // pred_check
          %p203 = pneg %p42
        $region26: #{tpu_custom_call.1} parent=23 // pred_check_branch
          %205 = sbr.rel (%p203) target = $region28
        $region27: #{tpu_custom_call.1} parent=23 // pred_region
          %s206 = sand.u32 %s32, 1
          %s207 = scalar_lea.sflag [#allocation3], %s206
          %s208 = sand.u32 %s32, 1
          %s209 = smul.addr %s208, 8
          %s210 = scalar_lea.vmem [#allocation2], %s209
          %s212 = ssub.s32 128, 128
          %213 = vsyncadd %s207, %s212
          %s214 = smul.addr %s22, 128
          %s215 = scalar_lea.hbm %s0, %s214
          %s217 = sshll.u32 %s210, 4
          %s218 = int_to_ptr.vmem [resolvable:$true] %s217
          %220 = dma.hbm_to_vmem [thread:$0]  %s215, 128, %s218, %s207
        $region28: #{tpu_custom_call.1} parent=23 // pred_fallthru
          _
        // Predicated region
        $region29: #{tpu_custom_call.1} parent=23 // pred_check
          %p221 = pneg %p68
        $region30: #{tpu_custom_call.1} parent=23 // pred_check_branch
          %223 = sbr.rel (%p221) target = $region32
        $region31: #{tpu_custom_call.1} parent=23 // pred_region
          %p224 = scmp.lt.s32.totalorder %s22, 1
          %s225 = scalar_select %p224, %s22, 1
          %s226 = scalar_lea.vmem %s1, %s225
        $region32: #{tpu_custom_call.1} parent=23 // pred_fallthru
          _
      $region24: #{tpu_custom_call.1} parent=5 // pred_fallthru
        _
      %p227 = scmp.le.s32.totalorder 1, %s22
      %p228 = scmp.lt.s32.totalorder %s22, 3
      %p229 = pnand %p227, %p228
      %p230 = pneg %p229
      // Predicated region
      $region33: #{tpu_custom_call.1} parent=5 // pred_check
        _
      $region34: #{tpu_custom_call.1} parent=5 // pred_check_branch
        %232 = sbr.rel (%p229) target = $region36
      $region35: #{tpu_custom_call.1} parent=5 // pred_region
        %s233 = ssub.s32 %s22, 1
        %s234 = sand.u32 %s35, 1
        %s235 = scalar_lea.sflag [#allocation3], %s234
        %s236 = sand.u32 %s35, 1
        %s237 = smul.addr %s236, 8
        %s238 = scalar_lea.vmem [#allocation2], %s237
        // Predicated region
        $region37: #{tpu_custom_call.1} parent=35 // pred_check
          %p239 = pneg %p48
        $region38: #{tpu_custom_call.1} parent=35 // pred_check_branch
          %241 = sbr.rel (%p239) target = $region40
        $region39: #{tpu_custom_call.1} parent=35 // pred_region
          %242 = dma.done %s235, 128
        $region40: #{tpu_custom_call.1} parent=35 // pred_fallthru
          _
        // Predicated region
        $region41: #{tpu_custom_call.1} parent=35 // pred_check
          %p243 = pneg %p95
        $region42: #{tpu_custom_call.1} parent=35 // pred_check_branch
          %245 = sbr.rel (%p243) target = $region44
        $region43: #{tpu_custom_call.1} parent=35 // pred_region
          %246 = dma.done [#allocation6], 256
        $region44: #{tpu_custom_call.1} parent=35 // pred_fallthru
          _
        %s247 = sand.u32 %s35, 1
        %s248 = scalar_lea.sflag [#allocation3], %s247
        %s249 = sand.u32 %s35, 1
        %s250 = smul.addr %s249, 8
        %s251 = scalar_lea.vmem [#allocation2], %s250
        %p252 = pneg %p48
        %p253 = pneg %p45
        %p254 = scmp.lt.s32.totalorder %s27, 1
        %s255 = scalar_select %p254, %s27, 1
        %s256 = scalar_lea.vmem %s1, %s255
        %p257 = pneg %p74
        %p258 = pneg %p71
        %p259 = pneg %p95
        %p260 = pneg %p92
        %p261 = pneg %p116
        %p262 = pneg %p113
        %p263 = pneg %p142
        %p264 = pneg %p139
        %s265 = sand.u32 %s129, 1
        %s266 = scalar_lea.sflag [#allocation4], %s265
        %s267 = sand.u32 %s129, 1
        %s268 = scalar_lea.vmem [#allocation7], %s267
        %p269 = pneg %p168
        %p270 = pneg %p165
        %s271 = sand.u32 %s155, 1
        %s272 = scalar_lea.sflag [#allocation9], %s271
        %s273 = sand.u32 %s155, 1
        %s274 = scalar_lea.vmem [#allocation8], %s273
        %p275 = scmp.lt.s32.totalorder %s27, 1
        %s276 = scalar_select %p275, %s27, 1
        %s277 = scalar_lea.vmem %s1, %s276
        %v278 = vld [vmem:[%s238] sm:$0xff]
        %v279 = vld [vmem:[#allocation5] sm:$0xff]
        %v280 = vld [vmem:[#allocation5 + $0x8] sm:$0xff]
        %vm281 = vcmask 130048
        %v283 = vsel %vm281, %v278, 0
        %285 = vmatprep.subr.mxu0 0.0
        %286 = vmatpush1.msra.mxu0 %v279
        %287 = vmatprep.subr.mxu0 0.0
        %288 = vmatpush1.msra.mxu0 %v280
        %289 = vmatprep.subr.mxu0 0.0
        %290 = vmatpush1.msra.mxu0 0.0
        %291 = vmatprep.subr.mxu0 0.0
        %292 = vmatpush1.msra.mxu0 0.0
        %293 = vmatprep.subr.mxu0 0.0
        %294 = vmatpush1.msra.mxu0 0.0
        %295 = vmatprep.subr.mxu0 0.0
        %296 = vmatpush1.msra.mxu0 0.0
        %297 = vmatprep.subr.mxu0 0.0
        %298 = vmatpush1.msra.mxu0 0.0
        %299 = vmatprep.subr.mxu0 0.0
        %300 = vmatpush1.msra.mxu0 0.0
        %301 = vmatprep.subr.mxu0 0.0
        %302 = vmatpush1.msra.mxu0 0.0
        %303 = vmatprep.subr.mxu0 0.0
        %304 = vmatpush1.msra.mxu0 0.0
        %305 = vmatprep.subr.mxu0 0.0
        %306 = vmatpush1.msra.mxu0 0.0
        %307 = vmatprep.subr.mxu0 0.0
        %308 = vmatpush1.msra.mxu0 0.0
        %309 = vmatprep.subr.mxu0 0.0
        %310 = vmatpush1.msra.mxu0 0.0
        %311 = vmatprep.subr.mxu0 0.0
        %312 = vmatpush1.msra.mxu0 0.0
        %313 = vmatprep.subr.mxu0 0.0
        %314 = vmatpush1.msra.mxu0 0.0
        %315 = vmatprep.subr.mxu0 0.0
        %316 = vmatpush1.msra.mxu0 0.0
        %317 = vmatprep.subr.mxu0 0.0
        %318 = vmatpush1.msra.mxu0 0.0
        %319 = vmatprep.subr.mxu0 0.0
        %320 = vmatpush1.msra.mxu0 0.0
        %321 = vmatprep.subr.mxu0 0.0
        %322 = vmatpush1.msra.mxu0 0.0
        %323 = vmatprep.subr.mxu0 0.0
        %324 = vmatpush1.msra.mxu0 0.0
        %325 = vmatprep.subr.mxu0 0.0
        %326 = vmatpush1.msra.mxu0 0.0
        %327 = vmatprep.subr.mxu0 0.0
        %328 = vmatpush1.msra.mxu0 0.0
        %329 = vmatprep.subr.mxu0 0.0
        %330 = vmatpush1.msra.mxu0 0.0
        %331 = vmatprep.subr.mxu0 0.0
        %332 = vmatpush1.msra.mxu0 0.0
        %333 = vmatprep.subr.mxu0 0.0
        %334 = vmatpush1.msra.mxu0 0.0
        %335 = vmatprep.subr.mxu0 0.0
        %336 = vmatpush1.msra.mxu0 0.0
        %337 = vmatprep.subr.mxu0 0.0
        %338 = vmatpush1.msra.mxu0 0.0
        %339 = vmatprep.subr.mxu0 0.0
        %340 = vmatpush1.msra.mxu0 0.0
        %341 = vmatprep.subr.mxu0 0.0
        %342 = vmatpush1.msra.mxu0 0.0
        %343 = vmatprep.subr.mxu0 0.0
        %344 = vmatpush1.msra.mxu0 0.0
        %345 = vmatprep.subr.mxu0 0.0
        %346 = vmatpush1.msra.mxu0 0.0
        %347 = vmatprep.subr.mxu0 0.0
        %348 = vmatpush1.msra.mxu0 0.0
        %349 = vmatprep.mubr.f32.mxu0 0.0
        %350 = vmatmul.mubr.f32.gmra.mrb[0].mxu0 %v283
        %v351 = vpop.f32.mrb[0].mxu0
        %v352 = vadd.f32 0.0, %v351
        %v353 = vpop.f32.mrb[0].mxu0
        %354 = vdwg.mxu0
        %356 = vrot.lane.b32.xlu0 %v352, 96
        %v357 = vpop.permute.xlu0 %356
        %359 = vxpose.xlu0.b32.start [1/16] %v357, 128
        %360 = vxpose.xlu0.b32.cont [2/16] 0.0, 128
        %361 = vxpose.xlu0.b32.cont [3/16] 0.0, 128
        %362 = vxpose.xlu0.b32.cont [4/16] 0.0, 128
        %363 = vxpose.xlu0.b32.cont [5/16] 0.0, 128
        %364 = vxpose.xlu0.b32.cont [6/16] 0.0, 128
        %365 = vxpose.xlu0.b32.cont [7/16] 0.0, 128
        %366 = vxpose.xlu0.b32.cont [8/16] 0.0, 128
        %367 = vxpose.xlu0.b32.cont [9/16] 0.0, 128
        %368 = vxpose.xlu0.b32.cont [10/16] 0.0, 128
        %369 = vxpose.xlu0.b32.cont [11/16] 0.0, 128
        %370 = vxpose.xlu0.b32.cont [12/16] 0.0, 128
        %371 = vxpose.xlu0.b32.cont [13/16] 0.0, 128
        %372 = vxpose.xlu0.b32.cont [14/16] 0.0, 128
        %373 = vxpose.xlu0.b32.cont [15/16] 0.0, 128
        %374 = vxpose.xlu0.b32.end [16/16] 0.0, 128
        %v375 = vpop.trf.xlu0
        %v376 = vpop.trf.xlu0
        %v377 = vpop.trf.xlu0
        %v378 = vpop.trf.xlu0
        %v379 = vpop.trf.xlu0
        %v380 = vpop.trf.xlu0
        %v381 = vpop.trf.xlu0
        %v382 = vpop.trf.xlu0
        %v383 = vpop.trf.xlu0
        %v384 = vpop.trf.xlu0
        %v385 = vpop.trf.xlu0
        %v386 = vpop.trf.xlu0
        %v387 = vpop.trf.xlu0
        %v388 = vpop.trf.xlu0
        %v389 = vpop.trf.xlu0
        %v390 = vpop.trf.xlu0
        %v391 = vld [vmem:[%s277] sm:$0x1]
        %v392 = vmul.f32 %v375, %v391
        %v393 = vsub.f32 %v391, 1.0
        %v394 = vmul.f32 %v393, 1e+09
        %v395 = vadd.f32 %v392, %v394
        %vm396 = vcmask 57344
        %v397 = vsel %vm396, %v395, -inf
        %398 = vmax.xlane.f32.xlu0 %v397
        %v399 = vpop.xlane.xlu0 %398
        %v400 = vsub.f32 %v395, %v399
        %v401 = vmul.f32 %v400, 1.442695
        %v402 = vpow.pop %v401
        %v403 = vsel %vm396, %v402, 0.0
        %404 = vadd.xlane.f32.xlu0 %v403
        %v405 = vpop.xlane.xlu0 %404
        %v406 = vrcp.pop %v405
        %v407 = vmul.f32 %v402, %v406
        %408 = vst.msk [vmem:[%s274] sm:$0x1] %vm396, %v407
        %v409 = vld [vmem:[%s3] sm:$0x1]
        %vm410 = vcmask 64512
        %v412 = vsel %vm410, %v407, 0
        %414 = vmatprep.subr.mxu0 0.0
        %415 = vmatpush1.msra.mxu0 %v352
        %416 = vmatprep.subr.mxu0 0.0
        %417 = vmatpush1.msra.mxu0 0.0
        %418 = vmatprep.subr.mxu0 0.0
        %419 = vmatpush1.msra.mxu0 0.0
        %420 = vmatprep.subr.mxu0 0.0
        %421 = vmatpush1.msra.mxu0 0.0
        %422 = vmatprep.subr.mxu0 0.0
        %423 = vmatpush1.msra.mxu0 0.0
        %424 = vmatprep.subr.mxu0 0.0
        %425 = vmatpush1.msra.mxu0 0.0
        %426 = vmatprep.subr.mxu0 0.0
        %427 = vmatpush1.msra.mxu0 0.0
        %428 = vmatprep.subr.mxu0 0.0
        %429 = vmatpush1.msra.mxu0 0.0
        %430 = vmatprep.subr.mxu0 0.0
        %431 = vmatpush1.msra.mxu0 0.0
        %432 = vmatprep.subr.mxu0 0.0
        %433 = vmatpush1.msra.mxu0 0.0
        %434 = vmatprep.subr.mxu0 0.0
        %435 = vmatpush1.msra.mxu0 0.0
        %436 = vmatprep.subr.mxu0 0.0
        %437 = vmatpush1.msra.mxu0 0.0
        %438 = vmatprep.subr.mxu0 0.0
        %439 = vmatpush1.msra.mxu0 0.0
        %440 = vmatprep.subr.mxu0 0.0
        %441 = vmatpush1.msra.mxu0 0.0
        %442 = vmatprep.subr.mxu0 0.0
        %443 = vmatpush1.msra.mxu0 0.0
        %444 = vmatprep.subr.mxu0 0.0
        %445 = vmatpush1.msra.mxu0 0.0
        %446 = vmatprep.subr.mxu0 0.0
        %447 = vmatpush1.msra.mxu0 0.0
        %448 = vmatprep.subr.mxu0 0.0
        %449 = vmatpush1.msra.mxu0 0.0
        %450 = vmatprep.subr.mxu0 0.0
        %451 = vmatpush1.msra.mxu0 0.0
        %452 = vmatprep.subr.mxu0 0.0
        %453 = vmatpush1.msra.mxu0 0.0
        %454 = vmatprep.subr.mxu0 0.0
        %455 = vmatpush1.msra.mxu0 0.0
        %456 = vmatprep.subr.mxu0 0.0
        %457 = vmatpush1.msra.mxu0 0.0
        %458 = vmatprep.subr.mxu0 0.0
        %459 = vmatpush1.msra.mxu0 0.0
        %460 = vmatprep.subr.mxu0 0.0
        %461 = vmatpush1.msra.mxu0 0.0
        %462 = vmatprep.subr.mxu0 0.0
        %463 = vmatpush1.msra.mxu0 0.0
        %464 = vmatprep.subr.mxu0 0.0
        %465 = vmatpush1.msra.mxu0 0.0
        %466 = vmatprep.subr.mxu0 0.0
        %467 = vmatpush1.msra.mxu0 0.0
        %468 = vmatprep.subr.mxu0 0.0
        %469 = vmatpush1.msra.mxu0 0.0
        %470 = vmatprep.subr.mxu0 0.0
        %471 = vmatpush1.msra.mxu0 0.0
        %472 = vmatprep.subr.mxu0 0.0
        %473 = vmatpush1.msra.mxu0 0.0
        %474 = vmatprep.subr.mxu0 0.0
        %475 = vmatpush1.msra.mxu0 0.0
        %476 = vmatprep.subr.mxu0 0.0
        %477 = vmatpush1.msra.mxu0 0.0
        %478 = vmatprep.mubr.f32.mxu0 0.0
        %479 = vmatmul.mubr.f32.gmra.mrb[0].mxu0 %v412
        %v480 = vpop.f32.mrb[0].mxu0
        %v481 = vadd.f32 %v409, %v480
        %v482 = vpop.f32.mrb[0].mxu0
        %483 = vdwg.mxu0
        %vm484 = vcmask 253952
        %485 = vst.msk [vmem:[%s268] sm:$0x1] %vm484, %v481
        %s486 = sand.u32 %s129, 1
        %s487 = scalar_lea.sflag [#allocation4], %s486
        %s488 = sand.u32 %s129, 1
        %s489 = scalar_lea.vmem [#allocation7], %s488
        %s490 = sand.u32 %s155, 1
        %s491 = scalar_lea.sflag [#allocation9], %s490
        %s492 = sand.u32 %s155, 1
        %s493 = scalar_lea.vmem [#allocation8], %s492
        // Predicated region
        $region45: #{tpu_custom_call.1} parent=35 // pred_check
          %p494 = pneg %p139
        $region46: #{tpu_custom_call.1} parent=35 // pred_check_branch
          %496 = sbr.rel (%p494) target = $region48
        $region47: #{tpu_custom_call.1} parent=35 // pred_region
          %s498 = ssub.s32 16, 16
          %499 = vsyncadd %s487, %s498
          %s500 = smul.addr %s27, 16
          %s501 = scalar_lea.hbm %s4, %s500
          %s503 = sshll.u32 %s489, 4
          %s504 = int_to_ptr.vmem [resolvable:$true] %s503
          %506 = dma.vmem_to_hbm [thread:$0]  %s504, 16, %s501, %s487
        $region48: #{tpu_custom_call.1} parent=35 // pred_fallthru
          _
        // Predicated region
        $region49: #{tpu_custom_call.1} parent=35 // pred_check
          %p507 = pneg %p165
        $region50: #{tpu_custom_call.1} parent=35 // pred_check_branch
          %509 = sbr.rel (%p507) target = $region52
        $region51: #{tpu_custom_call.1} parent=35 // pred_region
          %s511 = ssub.s32 16, 16
          %512 = vsyncadd %s491, %s511
          %s513 = smul.addr %s27, 16
          %s514 = scalar_lea.hbm %s5, %s513
          %s516 = sshll.u32 %s493, 4
          %s517 = int_to_ptr.vmem [resolvable:$true] %s516
          %519 = dma.vmem_to_hbm [thread:$0]  %s517, 16, %s514, %s491
        $region52: #{tpu_custom_call.1} parent=35 // pred_fallthru
          _
      $region36: #{tpu_custom_call.1} parent=5 // pred_fallthru
        _
      %p520 = scmp.le.s32.totalorder 2, %s22
      // Predicated region
      $region53: #{tpu_custom_call.1} parent=5 // pred_check
        %p521 = pneg %p520
      $region54: #{tpu_custom_call.1} parent=5 // pred_check_branch
        %523 = sbr.rel (%p521) target = $region56
      $region55: #{tpu_custom_call.1} parent=5 // pred_region
        %s524 = ssub.s32 %s22, 2
        // Predicated region
        $region57: #{tpu_custom_call.1} parent=55 // pred_check
          %p525 = pneg %p145
        $region58: #{tpu_custom_call.1} parent=55 // pred_check_branch
          %527 = sbr.rel (%p525) target = $region60
        $region59: #{tpu_custom_call.1} parent=55 // pred_region
          %s528 = sand.u32 %s130, 1
          %s529 = scalar_lea.sflag [#allocation4], %s528
          %s530 = sand.u32 %s130, 1
          %s531 = scalar_lea.vmem [#allocation7], %s530
          %532 = dma.done %s529, 16
        $region60: #{tpu_custom_call.1} parent=55 // pred_fallthru
          _
        // Predicated region
        $region61: #{tpu_custom_call.1} parent=55 // pred_check
          %p533 = pneg %p171
        $region62: #{tpu_custom_call.1} parent=55 // pred_check_branch
          %535 = sbr.rel (%p533) target = $region64
        $region63: #{tpu_custom_call.1} parent=55 // pred_region
          %s536 = sand.u32 %s156, 1
          %s537 = scalar_lea.sflag [#allocation9], %s536
          %s538 = sand.u32 %s156, 1
          %s539 = scalar_lea.vmem [#allocation8], %s538
          %540 = dma.done %s537, 16
        $region64: #{tpu_custom_call.1} parent=55 // pred_fallthru
          _
      $region56: #{tpu_custom_call.1} parent=5 // pred_fallthru
        _
    $region6: #{tpu_custom_call.1} parent=1 // loop_footer
      %s26 = sadd.s32 1, %s22
    $region7: #{tpu_custom_call.1} parent=1 // loop_footer_branch
      %21 = sbr.rel target = $region3
    $region8: #{tpu_custom_call.1} parent=1 // loop_exit
      _
    %541 = vsyncpa [#allocation3], 1
    %s542 = scalar_lea.sflag [#allocation3], 1
    %543 = vsyncpa %s542, 1
    %544 = vsyncpa [#allocation6], 1
    %545 = vsyncpa [#allocation4], 1
    %s546 = scalar_lea.sflag [#allocation4], 1
    %547 = vsyncpa %s546, 1
    %548 = vsyncpa [#allocation9], 1
    %s549 = scalar_lea.sflag [#allocation9], 1
    %550 = vsyncpa %s549, 1

</llo_original>
